<compile_context>
chip_gen: v5e
topology: v5e:2x2
jax: 0.10.0
libtpu: 0.0.40
codegen_flags: <defaults>
</compile_context>

<pallas_src>
import functools

import jax
import jax.numpy as jnp
import numpy as np
from jax.experimental import pallas as pl
from jax.experimental.pallas import tpu as pltpu

# Module-level constants implied by the PyTorch globals.
VECSIZE = 33        # length of phmz / psiz / each ykinput row
VECCNTR = 17        # center index: phmz[veccntr-1 : veccntr+2] = phi
INPUT_SIZE = 4      # 3 stencil coefficients + m
YSIZE = 1 + 32      # one constant (ones) vector + 32 random vectors

V_PAD = 128         # lane-padded vector length (native vreg lane width)
N_CORES = 2         # leading "parallel" grid axis (both TensorCores on v7x)


def _loss_kernel(maxm_ref, params_ref, ykt_ref, out_ref, *, eps, tiles_per_core):
    """One grid step = one (B_TILE, V_PAD) batch tile on one core.

    maxm_ref  : SMEM (n_tiles,) int32      -- prefetch: max(m) per batch tile
    params_ref: VMEM (B_TILE, 128) f32     -- cols 0:3 phi, col 3 m, cols 4:7 psi
    ykt_ref   : VMEM (128, 128)   f32      -- yk^T, zero padded (V x YSIZE block)
    out_ref   : VMEM (1, B_TILE, 128) f32  -- per-core resident loss-term block
    """
    core = pl.program_id(0)
    step = pl.program_id(1)

    @pl.when(step == 0)
    def _():
        out_ref[...] = jnp.zeros_like(out_ref)

    lane = jax.lax.broadcasted_iota(jnp.int32, (1, V_PAD), 1)
    interior = (lane >= 1) & (lane <= VECSIZE - 2)   # logical interior 1..31
    c0 = VECCNTR - 1                                 # 0-based left edge of center

    params = params_ref[...]                         # (B_TILE, 128)
    phi0 = params[:, 0:1]
    phi1 = params[:, 1:2]
    phi2 = params[:, 2:3]
    m_col = params[:, 3:4].astype(jnp.int32)         # truncation == torch .int()
    psi0 = params[:, 4:5]
    psi1 = params[:, 5:6]
    psi2 = params[:, 6:7]

    # Embed phi at the center via a single nested select.
    phmz = jnp.where(lane == c0, phi0,
           jnp.where(lane == c0 + 1, phi1,
           jnp.where(lane == c0 + 2, phi2, 0.0)))    # (B_TILE, 128)

    # 3-point correlation, run max(m)-1 times for the whole tile with a
    # per-row mask so each sample stops after its own m-1 iterations.
    def corr_step(it, ph):
        left = pltpu.roll(ph, 1, axis=1)             # ph[j-1] at position j
        right = pltpu.roll(ph, V_PAD - 1, axis=1)    # ph[j+1] at position j
        tmp = phi0 * left + phi1 * ph + phi2 * right
        tmp = jnp.where(interior, tmp, 0.0)          # boundaries / pad stay 0
        return jnp.where(it < m_col - 1, tmp, ph)

    max_m = maxm_ref[core * tiles_per_core + step]
    phmz = jax.lax.fori_loop(0, max_m - 1, corr_step, phmz)

    # <phmz, yk> for all 33 (padded to 128) yk rows at once on the MXU.
    ykt = ykt_ref[...]                                               # (128, 128)
    a = jnp.dot(phmz, ykt, preferred_element_type=jnp.float32)       # (B_TILE,128)

    # <psiz, yk> only touches the 3 center entries of yk -> 3 broadcast FMAs
    # against rows c0..c0+2 of yk^T instead of a second MXU matmul.
    yr0 = ykt[c0:c0 + 1, :]                                          # (1, 128)
    yr1 = ykt[c0 + 1:c0 + 2, :]
    yr2 = ykt[c0 + 2:c0 + 3, :]
    b = psi0 * yr0 + psi1 * yr1 + psi2 * yr2                         # (B_TILE,128)

    num = (a - b) * (a - b)
    den = (1.0 - a) * (1.0 - a) + eps
    # EUP approximate reciprocal + one Newton step (full f32 accuracy, no divide).
    r = pl.reciprocal(den, approx=True)
    r = r * (2.0 - den * r)
    terms = num * r
    # Padded rows (phi=psi=0, m=0) and padded yk columns give a=b=0 -> term 0.
    out_ref[...] += terms[None, :, :]


def non_galerkin_loss1_rand(inp, outp, ykinput, eps=0.01):
    """inp: (bsize, 4) f32 (phi + m), outp: (bsize, 3) f32,
    ykinput: (YSIZE, VECSIZE) f32  ->  scalar f32 loss."""
    bsize = inp.shape[0]
    ysize, vecsize = ykinput.shape

    def cdiv(a, m):
        return -(-a // m)

    def round_up(a, m):
        return cdiv(a, m) * m

    b_tile = min(256, round_up(cdiv(bsize, N_CORES), 8))
    tiles_per_core = max(1, cdiv(bsize, N_CORES * b_tile))
    n_tiles = N_CORES * tiles_per_core
    bsize_pad = n_tiles * b_tile

    # Pack [phi(3), m(1), psi(3)] into a lane-padded (bsize_pad, 128) VMEM tile.
    # Padded rows are all-zero -> m=0 -> zero loss contribution.
    params = jnp.zeros((bsize_pad, V_PAD), jnp.float32)
    params = params.at[:bsize, 0:INPUT_SIZE].set(inp.astype(jnp.float32))
    params = params.at[:bsize, INPUT_SIZE:INPUT_SIZE + 3].set(
        outp.astype(jnp.float32))

    # Per-tile max(m) -> tiny SMEM scalar-prefetch array (trip count of the
    # masked correlation loop).
    m_int = inp[:, INPUT_SIZE - 1].astype(jnp.int32)
    m_pad = jnp.zeros((bsize_pad,), jnp.int32).at[:bsize].set(m_int)
    max_m = jnp.max(m_pad.reshape(n_tiles, b_tile), axis=1)     # (n_tiles,)

    # yk^T zero-padded to 128x128: rows = vector index, cols = yk row index.
    ykt = jnp.zeros((V_PAD, V_PAD), jnp.float32)
    ykt = ykt.at[:vecsize, :ysize].set(ykinput.astype(jnp.float32).T)

    grid_spec = pltpu.PrefetchScalarGridSpec(
        num_scalar_prefetch=1,
        grid=(N_CORES, tiles_per_core),
        in_specs=[
            pl.BlockSpec((b_tile, V_PAD),
                         lambda c, i, mm: (c * tiles_per_core + i, 0)),
            pl.BlockSpec((V_PAD, V_PAD), lambda c, i, mm: (0, 0)),
        ],
        out_specs=pl.BlockSpec((1, b_tile, V_PAD), lambda c, i, mm: (c, 0, 0)),
    )

    partial = pl.pallas_call(
        functools.partial(_loss_kernel, eps=eps, tiles_per_core=tiles_per_core),
        out_shape=jax.ShapeDtypeStruct((N_CORES, b_tile, V_PAD), jnp.float32),
        grid_spec=grid_spec,
        compiler_params=pltpu.CompilerParams(
            dimension_semantics=("parallel", "arbitrary")),
    )(max_m, params, ykt)

    # Final tiny reduction of the lane-dense per-core partials.
    return jnp.sum(partial)


def _reference(inp, outp, yk, eps=0.01):
    """Pure-numpy replica of the PyTorch forward, for verification."""
    inp = np.asarray(inp, np.float32)
    outp = np.asarray(outp, np.float32)
    yk = np.asarray(yk, np.float32)
    loss = 0.0
    for i in range(inp.shape[0]):
        phi = inp[i, :INPUT_SIZE - 1]
        m = int(inp[i, INPUT_SIZE - 1])
        phmz = np.zeros(VECSIZE, np.float32)
        phmz[VECCNTR - 1:VECCNTR + 2] = phi
        tmp = np.zeros(VECSIZE, np.float32)
        for _ in range(m - 1):
            for j in range(1, VECSIZE - 1):
                tmp[j] = float(np.dot(phi, phmz[j - 1:j + 2]))
            phmz = tmp.copy()
        psiz = np.zeros(VECSIZE, np.float32)
        psiz[VECCNTR - 1:VECCNTR + 2] = outp[i]
        for k in range(yk.shape[0]):
            a = float(np.dot(phmz, yk[k]))
            b = float(np.dot(psiz, yk[k]))
            loss += (a - b) ** 2 / ((1.0 - a) ** 2 + eps)
    return np.float32(loss)


if __name__ == "__main__":
    key = jax.random.PRNGKey(0)
    k_phi, k_psi, k_yk = jax.random.split(key, 3)

    bsize = 5
    # input[:, :3] = phi stencil, input[:, 3] = m (iteration count, as float).
    phi = jax.random.uniform(k_phi, (bsize, INPUT_SIZE - 1), jnp.float32)
    m_col = jnp.array([[3.0], [2.0], [4.0], [1.0], [2.0]], jnp.float32)
    inp = jnp.concatenate([phi, m_col], axis=1)                  # (5, 4)
    outp = jax.random.uniform(k_psi, (bsize, 3), jnp.float32)    # (5, 3)

    # Deterministic stand-in for the module's __init__ buffer:
    # one row of ones + 32 "random" rows.
    ones_row = jnp.ones((1, VECSIZE), jnp.float32)
    rnd_rows = jax.random.uniform(k_yk, (32, VECSIZE), jnp.float32)
    ykinput = jnp.concatenate([ones_row, rnd_rows], axis=0)      # (33, 33)

    loss = non_galerkin_loss1_rand(inp, outp, ykinput, eps=0.01)
    loss = jax.block_until_ready(loss)

    ref = _reference(np.asarray(inp), np.asarray(outp), np.asarray(ykinput))
    np.testing.assert_allclose(np.asarray(loss), ref, rtol=1e-3, atol=1e-3)

    print("KERNEL_OK")
</pallas_src>

<mosaic_0001>
module attributes {stable_mosaic.version = 11 : i64} {
  func.func @_loss_kernel(%arg0: i32, %arg1: i32, %arg2: memref<2xi32, #tpu.memory_space<smem>>, %arg3: memref<8x128xf32, #tpu.memory_space<vmem>>, %arg4: memref<128x128xf32, #tpu.memory_space<vmem>>, %arg5: memref<1x8x128xf32, #tpu.memory_space<vmem>>) attributes {dimension_semantics = [#tpu.dimension_semantics<parallel>, #tpu.dimension_semantics<arbitrary>], iteration_bounds = array<i64: 2, 1>, scalar_prefetch = 1 : i64, scratch_operands = 0 : i64, tpu.core_type = #tpu.core_type<tc>, window_params = [{transform_indices = @transform_0, window_bounds = array<i64: 8, 128>}, {pipeline_mode = #tpu.pipeline_mode<synchronous>, transform_indices = @transform_1, window_bounds = array<i64: 128, 128>}, {transform_indices = @transform_2, window_bounds = array<i64: 1, 8, 128>}]} {
    %c0_i32 = arith.constant 0 : i32
    %0 = arith.cmpi eq, %arg1, %c0_i32 : i32
    %1 = arith.extui %0 : i1 to i32
    %c0_i32_0 = arith.constant 0 : i32
    %2 = arith.cmpi ne, %1, %c0_i32_0 : i32
    scf.if %2 {
      %cst_19 = arith.constant 0.000000e+00 : f32
      %84 = vector.broadcast %cst_19 : f32 to vector<1x8x128xf32>
      %c0_20 = arith.constant 0 : index
      %c0_21 = arith.constant 0 : index
      %c0_22 = arith.constant 0 : index
      %85 = vector.load %arg5[%c0_20, %c0_21, %c0_22] : memref<1x8x128xf32, #tpu.memory_space<vmem>>, vector<1x8x128xf32>
      tpu.vector_store %arg5[%c0_20, %c0_21, %c0_22], %84 {strides = array<i32>} : memref<1x8x128xf32, #tpu.memory_space<vmem>>, vector<1x8x128xf32>,
    } else {
    }
    %3 = tpu.iota {dimensions = array<i32: 1>} : vector<1x128xi32>
    %c1_i32 = arith.constant 1 : i32
    %4 = vector.broadcast %c1_i32 : i32 to vector<1x128xi32>
    %5 = arith.cmpi sge, %3, %4 : vector<1x128xi32>
    %c31_i32 = arith.constant 31 : i32
    %6 = vector.broadcast %c31_i32 : i32 to vector<1x128xi32>
    %7 = arith.cmpi sle, %3, %6 : vector<1x128xi32>
    %8 = arith.andi %5, %7 : vector<1x128xi1>
    %c0 = arith.constant 0 : index
    %c0_1 = arith.constant 0 : index
    %9 = vector.load %arg3[%c0, %c0_1] : memref<8x128xf32, #tpu.memory_space<vmem>>, vector<8x128xf32>
    %10 = vector.extract_strided_slice %9 {offsets = [0, 0], sizes = [8, 1], strides = [1, 1]} : vector<8x128xf32> to vector<8x1xf32>
    %11 = vector.extract_strided_slice %9 {offsets = [0, 1], sizes = [8, 1], strides = [1, 1]} : vector<8x128xf32> to vector<8x1xf32>
    %12 = vector.extract_strided_slice %9 {offsets = [0, 2], sizes = [8, 1], strides = [1, 1]} : vector<8x128xf32> to vector<8x1xf32>
    %13 = vector.extract_strided_slice %9 {offsets = [0, 3], sizes = [8, 1], strides = [1, 1]} : vector<8x128xf32> to vector<8x1xf32>
    %14 = arith.fptosi %13 : vector<8x1xf32> to vector<8x1xi32>
    %15 = vector.extract_strided_slice %9 {offsets = [0, 4], sizes = [8, 1], strides = [1, 1]} : vector<8x128xf32> to vector<8x1xf32>
    %16 = vector.extract_strided_slice %9 {offsets = [0, 5], sizes = [8, 1], strides = [1, 1]} : vector<8x128xf32> to vector<8x1xf32>
    %17 = vector.extract_strided_slice %9 {offsets = [0, 6], sizes = [8, 1], strides = [1, 1]} : vector<8x128xf32> to vector<8x1xf32>
    %c16_i32 = arith.constant 16 : i32
    %18 = vector.broadcast %c16_i32 : i32 to vector<1x128xi32>
    %19 = arith.cmpi eq, %3, %18 : vector<1x128xi32>
    %c17_i32 = arith.constant 17 : i32
    %20 = vector.broadcast %c17_i32 : i32 to vector<1x128xi32>
    %21 = arith.cmpi eq, %3, %20 : vector<1x128xi32>
    %c18_i32 = arith.constant 18 : i32
    %22 = vector.broadcast %c18_i32 : i32 to vector<1x128xi32>
    %23 = arith.cmpi eq, %3, %22 : vector<1x128xi32>
    %cst = arith.constant 0.000000e+00 : f32
    %24 = vector.shape_cast %23 : vector<1x128xi1> to vector<1x128xi1>
    %25 = vector.broadcast %24 : vector<1x128xi1> to vector<8x128xi1>
    %26 = vector.shape_cast %12 : vector<8x1xf32> to vector<8x1xf32>
    %27 = vector.broadcast %26 : vector<8x1xf32> to vector<8x128xf32>
    %28 = vector.broadcast %cst : f32 to vector<8x128xf32>
    %29 = arith.select %25, %27, %28 : vector<8x128xi1>, vector<8x128xf32>
    %30 = vector.shape_cast %21 : vector<1x128xi1> to vector<1x128xi1>
    %31 = vector.broadcast %30 : vector<1x128xi1> to vector<8x128xi1>
    %32 = vector.shape_cast %11 : vector<8x1xf32> to vector<8x1xf32>
    %33 = vector.broadcast %32 : vector<8x1xf32> to vector<8x128xf32>
    %34 = arith.select %31, %33, %29 : vector<8x128xi1>, vector<8x128xf32>
    %35 = vector.shape_cast %19 : vector<1x128xi1> to vector<1x128xi1>
    %36 = vector.broadcast %35 : vector<1x128xi1> to vector<8x128xi1>
    %37 = vector.shape_cast %10 : vector<8x1xf32> to vector<8x1xf32>
    %38 = vector.broadcast %37 : vector<8x1xf32> to vector<8x128xf32>
    %39 = arith.select %36, %38, %34 : vector<8x128xi1>, vector<8x128xf32>
    %c1_i32_2 = arith.constant 1 : i32
    %40 = arith.muli %arg0, %c1_i32_2 : i32
    %41 = arith.addi %40, %arg1 : i32
    %42 = arith.index_cast %41 : i32 to index
    %43 = memref.load %arg2[%42] : memref<2xi32, #tpu.memory_space<smem>>
    %c1_i32_3 = arith.constant 1 : i32
    %44 = arith.subi %43, %c1_i32_3 : i32
    %c0_i32_4 = arith.constant 0 : i32
    %45 = arith.subi %44, %c0_i32_4 : i32
    %46 = arith.addi %c0_i32_4, %45 : i32
    %c1_i32_5 = arith.constant 1 : i32
    %47 = scf.for %arg6 = %c0_i32_4 to %46 step %c1_i32_5 iter_args(%arg7 = %39) -> (vector<8x128xf32>)  : i32 {
      %c1_i32_19 = arith.constant 1 : i32
      %84 = tpu.dynamic_rotate %arg7 by %c1_i32_19 dim 1 : vector<8x128xf32>, i32 -> vector<8x128xf32>
      %c127_i32 = arith.constant 127 : i32
      %85 = tpu.dynamic_rotate %arg7 by %c127_i32 dim 1 : vector<8x128xf32>, i32 -> vector<8x128xf32>
      %86 = vector.broadcast %10 : vector<8x1xf32> to vector<8x128xf32>
      %87 = arith.mulf %86, %84 : vector<8x128xf32>
      %88 = vector.broadcast %11 : vector<8x1xf32> to vector<8x128xf32>
      %89 = arith.mulf %88, %arg7 : vector<8x128xf32>
      %90 = arith.addf %87, %89 : vector<8x128xf32>
      %91 = vector.broadcast %12 : vector<8x1xf32> to vector<8x128xf32>
      %92 = arith.mulf %91, %85 : vector<8x128xf32>
      %93 = arith.addf %90, %92 : vector<8x128xf32>
      %cst_20 = arith.constant 0.000000e+00 : f32
      %94 = vector.shape_cast %8 : vector<1x128xi1> to vector<1x128xi1>
      %95 = vector.broadcast %94 : vector<1x128xi1> to vector<8x128xi1>
      %96 = vector.broadcast %cst_20 : f32 to vector<8x128xf32>
      %97 = arith.select %95, %93, %96 : vector<8x128xi1>, vector<8x128xf32>
      %c1_i32_21 = arith.constant 1 : i32
      %98 = vector.broadcast %c1_i32_21 : i32 to vector<8x1xi32>
      %99 = arith.subi %14, %98 : vector<8x1xi32>
      %100 = vector.broadcast %arg6 : i32 to vector<8x1xi32>
      %101 = arith.cmpi slt, %100, %99 : vector<8x1xi32>
      %102 = vector.shape_cast %101 : vector<8x1xi1> to vector<8x1xi1>
      %103 = vector.broadcast %102 : vector<8x1xi1> to vector<8x128xi1>
      %104 = arith.select %103, %97, %arg7 : vector<8x128xi1>, vector<8x128xf32>
      scf.yield %104 : vector<8x128xf32>
    }
    %c0_6 = arith.constant 0 : index
    %c0_7 = arith.constant 0 : index
    %48 = vector.load %arg4[%c0_6, %c0_7] : memref<128x128xf32, #tpu.memory_space<vmem>>, vector<128x128xf32>
    %cst_8 = arith.constant dense<0.000000e+00> : vector<8x128xf32>
    %49 = tpu.matmul %47, %48, %cst_8 {dimension_numbers = #tpu.dot_dimension_numbers<[1], [0], [0], [1], [0, 0, 1, 1], [], []>} : vector<8x128xf32>, vector<128x128xf32>, vector<8x128xf32> -> vector<8x128xf32>
    %50 = vector.extract_strided_slice %48 {offsets = [16, 0], sizes = [1, 128], strides = [1, 1]} : vector<128x128xf32> to vector<1x128xf32>
    %51 = vector.extract_strided_slice %48 {offsets = [17, 0], sizes = [1, 128], strides = [1, 1]} : vector<128x128xf32> to vector<1x128xf32>
    %52 = vector.extract_strided_slice %48 {offsets = [18, 0], sizes = [1, 128], strides = [1, 1]} : vector<128x128xf32> to vector<1x128xf32>
    %53 = vector.broadcast %15 : vector<8x1xf32> to vector<8x128xf32>
    %54 = vector.broadcast %50 : vector<1x128xf32> to vector<8x128xf32>
    %55 = arith.mulf %53, %54 : vector<8x128xf32>
    %56 = vector.broadcast %16 : vector<8x1xf32> to vector<8x128xf32>
    %57 = vector.broadcast %51 : vector<1x128xf32> to vector<8x128xf32>
    %58 = arith.mulf %56, %57 : vector<8x128xf32>
    %59 = arith.addf %55, %58 : vector<8x128xf32>
    %60 = vector.broadcast %17 : vector<8x1xf32> to vector<8x128xf32>
    %61 = vector.broadcast %52 : vector<1x128xf32> to vector<8x128xf32>
    %62 = arith.mulf %60, %61 : vector<8x128xf32>
    %63 = arith.addf %59, %62 : vector<8x128xf32>
    %64 = arith.subf %49, %63 : vector<8x128xf32>
    %65 = arith.subf %49, %63 : vector<8x128xf32>
    %66 = arith.mulf %64, %65 : vector<8x128xf32>
    %cst_9 = arith.constant 1.000000e+00 : f32
    %67 = vector.broadcast %cst_9 : f32 to vector<8x128xf32>
    %68 = arith.subf %67, %49 : vector<8x128xf32>
    %cst_10 = arith.constant 1.000000e+00 : f32
    %69 = vector.broadcast %cst_10 : f32 to vector<8x128xf32>
    %70 = arith.subf %69, %49 : vector<8x128xf32>
    %71 = arith.mulf %68, %70 : vector<8x128xf32>
    %cst_11 = arith.constant 0.00999999977 : f32
    %72 = vector.broadcast %cst_11 : f32 to vector<8x128xf32>
    %73 = arith.addf %71, %72 : vector<8x128xf32>
    %74 = tpu.reciprocal %73 {approx = true} : vector<8x128xf32> -> vector<8x128xf32>
    %75 = arith.mulf %73, %74 : vector<8x128xf32>
    %cst_12 = arith.constant 2.000000e+00 : f32
    %76 = vector.broadcast %cst_12 : f32 to vector<8x128xf32>
    %77 = arith.subf %76, %75 : vector<8x128xf32>
    %78 = arith.mulf %74, %77 : vector<8x128xf32>
    %79 = arith.mulf %66, %78 : vector<8x128xf32>
    %c0_13 = arith.constant 0 : index
    %c0_14 = arith.constant 0 : index
    %c0_15 = arith.constant 0 : index
    %80 = vector.load %arg5[%c0_13, %c0_14, %c0_15] : memref<1x8x128xf32, #tpu.memory_space<vmem>>, vector<1x8x128xf32>
    %81 = vector.shape_cast %79 : vector<8x128xf32> to vector<1x8x128xf32>
    %82 = arith.addf %80, %81 : vector<1x8x128xf32>
    %c0_16 = arith.constant 0 : index
    %c0_17 = arith.constant 0 : index
    %c0_18 = arith.constant 0 : index
    %83 = vector.load %arg5[%c0_16, %c0_17, %c0_18] : memref<1x8x128xf32, #tpu.memory_space<vmem>>, vector<1x8x128xf32>
    tpu.vector_store %arg5[%c0_16, %c0_17, %c0_18], %82 {strides = array<i32>} : memref<1x8x128xf32, #tpu.memory_space<vmem>>, vector<1x8x128xf32>,
    return
  }
  func.func @transform_0(%arg0: i32, %arg1: i32, %arg2: memref<2xi32, #tpu.memory_space<smem>>) -> (i32, i32) {
    %c1_i32 = arith.constant 1 : i32
    %0 = arith.muli %arg0, %c1_i32 : i32
    %1 = arith.addi %0, %arg1 : i32
    %c0_i32 = arith.constant 0 : i32
    %c0_i32_0 = arith.constant 0 : i32
    return %1, %c0_i32 : i32, i32
  }
  func.func @transform_1(%arg0: i32, %arg1: i32, %arg2: memref<2xi32, #tpu.memory_space<smem>>) -> (i32, i32) {
    %c0_i32 = arith.constant 0 : i32
    %c0_i32_0 = arith.constant 0 : i32
    %c0_i32_1 = arith.constant 0 : i32
    return %c0_i32, %c0_i32_0 : i32, i32
  }
  func.func @transform_2(%arg0: i32, %arg1: i32, %arg2: memref<2xi32, #tpu.memory_space<smem>>) -> (i32, i32, i32) {
    %c0_i32 = arith.constant 0 : i32
    %c0_i32_0 = arith.constant 0 : i32
    %c0_i32_1 = arith.constant 0 : i32
    return %arg0, %c0_i32, %c0_i32_0 : i32, i32, i32
  }
}

</mosaic_0001>

<llo_original>
// kernel: tpu_custom_call.1
$region0: #{tpu_custom_call.1}
  #allocation0 [shape = 'u32[]', space=smem, size = 0x4, offset = 0x4, fixed_abs, tag = 'smem constant byte address 0x4 - core index']
  #allocation1 [shape = 'u32[72,128]{1,0:T(1,128)}', space=vmem, size = 0x9000, scoped, tag = 'internal scratch']
  #allocation2 [shape = 's32[1]{0}', space=sflag, size = 0x4, scoped, tag = 'scoped memory for tpu_custom_call.1']
  #allocation3 [shape = 'u8[512]{0}', space=smem, size = 0x200, scoped, tag = 'prefetched SMEM operand 0']
  %s0 = inlined_call_operand.hbm [shape: s32[2], index: 0, kind: input, shape index: {}]
  %s1 = inlined_call_operand.hbm [shape: f32[16,128], index: 1, kind: input, shape index: {}]
  %s2 = inlined_call_operand.hbm [shape: f32[128,128], index: 2, kind: input, shape index: {}]
  %s3 = inlined_call_operand.hbm [shape: f32[2,8,128], index: 3, kind: output, shape index: {}]
  %s4 = sld [smem:[#allocation0]]
  $region60: #{tpu_custom_call.1} parent=0
    _
  %s6 = ssub.s32 1, %s4
  %s7 = scalar_select 0, %s6, %s4
  %s9 = sshll.u32 %s0, 4
  %s10 = int_to_ptr.hbm [resolvable:$true] %s9
  %12 = dma.hbm_to_smem %s10, 16, [#allocation3], [#allocation2]
  %14 = dma.done [#allocation2], 16
  %15 = sfence
  $region1: #{tpu_custom_call.1} parent=0
    #allocation4 [shape = 'u8[8192]{0}', space=vmem, size = 0x2000, scoped, tag = 'input window, operand 1']
    #allocation5 [shape = 's32[2]{0}', space=sflag, size = 0x8, scoped, tag = 'scoped memory for tpu_custom_call.1']
    #allocation6 [shape = 's32[2]{0}', space=sflag, size = 0x8, scoped, tag = 'scoped memory for tpu_custom_call.1']
    #allocation7 [shape = 'u8[65536]{0}', space=vmem, size = 0x10000, scoped, tag = 'input window, operand 2, single buffered']
    #allocation8 [shape = 's32[1]{0}', space=sflag, size = 0x4, scoped, tag = 'scoped memory for tpu_custom_call.1']
    #allocation9 [shape = 'u8[8192]{0}', space=vmem, size = 0x2000, scoped, tag = 'output window, operand 0']
    %16 = vsyncpa [#allocation5], 0
    %s17 = scalar_lea.sflag [#allocation5], 1
    %18 = vsyncpa %s17, 0
    %19 = vsyncpa [#allocation8], 0
    %20 = vsyncpa [#allocation6], 0
    %s21 = scalar_lea.sflag [#allocation6], 1
    %22 = vsyncpa %s21, 0
    loop: start=0, step=1, limit=4
    $region2: #{tpu_custom_call.1} parent=1 // loop_pre_header
      _
    $region3: #{tpu_custom_call.1} parent=1 // loop_header
      %s24 = sphi 0, %s28
      %p25 = scmp.ge.s32.totalorder %s24, 4
      %s31 = sphi 0, %s43
      %s32 = sphi 0, %s39
      %s33 = sphi 0, %s31
      %s34 = sphi 0, %s32
      %s35 = sphi 0, %s33
      %s36 = sphi 0, %s34
      %s48 = sphi 0, %s50
      %s51 = sphi 0, %s48
      %s52 = sphi 0, %s51
      %s68 = sphi 0, %s52
      %s72 = sphi 0, %s72
      %s74 = sphi 0, %s72
      %s75 = sphi 0, %s74
      %s89 = sphi 0, %s75
      %s95 = sphi 0, %s97
      %s98 = sphi 0, %s95
      %s99 = sphi 0, %s98
      %s115 = sphi 0, %s99
    $region4: #{tpu_custom_call.1} parent=1 // loop_header_branch
      %27 = sbr.rel (%p25) target = $region8
    $region5: #{tpu_custom_call.1} parent=1 // loop_body
      %s29 = ssub.s32 %s24, 1
      %s30 = ssub.s32 %s24, 2
      %s37 = sadd.s32 1, %s32
      %p38 = scmp.ge.s32.totalorder %s37, 1
      %s39 = scalar_select %p38, 0, %s37
      %s40 = sadd.s32 1, %s31
      %s41 = scalar_select %p38, %s40, %s31
      %p42 = scmp.ge.s32.totalorder %s41, 2
      %s43 = scalar_select %p42, 0, %s41
      %s44 = sadd.s32 %s31, %s32
      %s45 = sadd.s32 %s43, %s39
      %s46 = ssub.s32 %s44, %s45
      %p47 = scmp.eq.s32.totalorder %s46, 0
      %s49 = sadd.s32 %s48, 1
      %s50 = scalar_select %p47, %s48, %s49
      %p53 = pneg %p47
      %p54 = scmp.eq.s32.totalorder %s24, 1
      %p55 = por %p53, %p54
      %p56 = scmp.ne.s32.totalorder %s48, %s51
      %p57 = scmp.eq.s32.totalorder %s24, 0
      %p58 = por %p56, %p57
      %p59 = scmp.ne.s32.totalorder %s48, %s51
      %p60 = scmp.eq.s32.totalorder %s29, 1
      %p61 = por %p59, %p60
      %p62 = scmp.ne.s32.totalorder %s51, %s52
      %p63 = scmp.eq.s32.totalorder %s29, 0
      %p64 = por %p62, %p63
      %p65 = scmp.ne.s32.totalorder %s51, %s52
      %p66 = scmp.eq.s32.totalorder %s30, 1
      %p67 = por %p65, %p66
      %p69 = scmp.ne.s32.totalorder %s52, %s68
      %p70 = scmp.eq.s32.totalorder %s30, 0
      %p71 = por %p69, %p70
      %s73 = sadd.s32 %s72, 1
      %p76 = scmp.eq.s32.totalorder %s24, 1
      %p77 = scmp.ne.s32.totalorder %s72, %s74
      %p78 = scmp.eq.s32.totalorder %s24, 0
      %p79 = por %p77, %p78
      %p80 = scmp.ne.s32.totalorder %s72, %s74
      %p81 = scmp.eq.s32.totalorder %s29, 1
      %p82 = por %p80, %p81
      %p83 = scmp.ne.s32.totalorder %s74, %s75
      %p84 = scmp.eq.s32.totalorder %s29, 0
      %p85 = por %p83, %p84
      %p86 = scmp.ne.s32.totalorder %s74, %s75
      %p87 = scmp.eq.s32.totalorder %s30, 1
      %p88 = por %p86, %p87
      %p90 = scmp.ne.s32.totalorder %s75, %s89
      %p91 = scmp.eq.s32.totalorder %s30, 0
      %p92 = por %p90, %p91
      %s93 = ssub.s32 %s31, %s43
      %p94 = scmp.eq.s32.totalorder %s93, 0
      %s96 = sadd.s32 %s95, 1
      %s97 = scalar_select %p94, %s95, %s96
      %p100 = pneg %p94
      %p101 = scmp.eq.s32.totalorder %s24, 1
      %p102 = por %p100, %p101
      %p103 = scmp.ne.s32.totalorder %s95, %s98
      %p104 = scmp.eq.s32.totalorder %s24, 0
      %p105 = por %p103, %p104
      %p106 = scmp.ne.s32.totalorder %s95, %s98
      %p107 = scmp.eq.s32.totalorder %s29, 1
      %p108 = por %p106, %p107
      %p109 = scmp.ne.s32.totalorder %s98, %s99
      %p110 = scmp.eq.s32.totalorder %s29, 0
      %p111 = por %p109, %p110
      %p112 = scmp.ne.s32.totalorder %s98, %s99
      %p113 = scmp.eq.s32.totalorder %s30, 1
      %p114 = por %p112, %p113
      %p116 = scmp.ne.s32.totalorder %s99, %s115
      %p117 = scmp.eq.s32.totalorder %s30, 0
      %p118 = por %p116, %p117
      %p119 = scmp.le.s32.totalorder 1, %s24
      %p120 = scmp.lt.s32.totalorder %s24, 3
      %p121 = pnand %p119, %p120
      %p122 = pneg %p121
      // Predicated region
      $region9: #{tpu_custom_call.1} parent=5 // pred_check
        _
      $region10: #{tpu_custom_call.1} parent=5 // pred_check_branch
        %124 = sbr.rel (%p121) target = $region12
      $region11: #{tpu_custom_call.1} parent=5 // pred_region
        %s125 = ssub.s32 %s24, 1
        // Predicated region
        $region13: #{tpu_custom_call.1} parent=11 // pred_check
          %p126 = pneg %p85
        $region14: #{tpu_custom_call.1} parent=11 // pred_check_branch
          %128 = sbr.rel (%p126) target = $region16
        $region15: #{tpu_custom_call.1} parent=11 // pred_region
          %130 = vsyncadd [#allocation8], 0
          %s131 = sshll.u32 %s2, 4
          %s132 = int_to_ptr.hbm [resolvable:$true] %s131
          %s133 = sshll.u32 [#allocation7], 4
          %s134 = int_to_ptr.vmem [resolvable:$true] %s133
          %139 = dma.hbm_to_vmem [thread:$0]  %s132, 2048, %s134, [#allocation8], 128, 128, 8
        $region16: #{tpu_custom_call.1} parent=11 // pred_fallthru
          _
      $region12: #{tpu_custom_call.1} parent=5 // pred_fallthru
        _
      %p140 = scmp.lt.s32.totalorder %s24, 2
      // Predicated region
      $region17: #{tpu_custom_call.1} parent=5 // pred_check
        %p141 = pneg %p140
      $region18: #{tpu_custom_call.1} parent=5 // pred_check_branch
        %143 = sbr.rel (%p141) target = $region20
      $region19: #{tpu_custom_call.1} parent=5 // pred_region
        // Predicated region
        $region21: #{tpu_custom_call.1} parent=19 // pred_check
          %p144 = pneg %p58
        $region22: #{tpu_custom_call.1} parent=19 // pred_check_branch
          %146 = sbr.rel (%p144) target = $region24
        $region23: #{tpu_custom_call.1} parent=19 // pred_region
          %s147 = sand.u32 %s48, 1
          %s148 = scalar_lea.sflag [#allocation5], %s147
          %s149 = sand.u32 %s48, 1
          %s150 = smul.addr %s149, 8
          %s151 = scalar_lea.vmem [#allocation4], %s150
          %s152 = sadd.s32 %s31, %s32
          %154 = vsyncadd %s148, 0
          %s155 = smul.addr %s152, 8
          %s156 = scalar_lea.hbm %s1, %s155
          %s158 = sshll.u32 %s156, 4
          %s159 = int_to_ptr.hbm [resolvable:$true] %s158
          %s160 = sshll.u32 %s151, 4
          %s161 = int_to_ptr.vmem [resolvable:$true] %s160
          %163 = dma.hbm_to_vmem [thread:$0]  %s159, 128, %s161, %s148
        $region24: #{tpu_custom_call.1} parent=19 // pred_fallthru
          _
      $region20: #{tpu_custom_call.1} parent=5 // pred_fallthru
        _
      %p164 = scmp.le.s32.totalorder 1, %s24
      %p165 = scmp.lt.s32.totalorder %s24, 3
      %p166 = pnand %p164, %p165
      %p167 = pneg %p166
      // Predicated region
      $region25: #{tpu_custom_call.1} parent=5 // pred_check
        _
      $region26: #{tpu_custom_call.1} parent=5 // pred_check_branch
        %169 = sbr.rel (%p166) target = $region28
      $region27: #{tpu_custom_call.1} parent=5 // pred_region
        %s170 = ssub.s32 %s24, 1
        %s171 = sand.u32 %s51, 1
        %s172 = scalar_lea.sflag [#allocation5], %s171
        %s173 = sand.u32 %s51, 1
        %s174 = smul.addr %s173, 8
        %s175 = scalar_lea.vmem [#allocation4], %s174
        // Predicated region
        $region29: #{tpu_custom_call.1} parent=27 // pred_check
          %p176 = pneg %p64
        $region30: #{tpu_custom_call.1} parent=27 // pred_check_branch
          %178 = sbr.rel (%p176) target = $region32
        $region31: #{tpu_custom_call.1} parent=27 // pred_region
          %180 = dma.done %s172, 128
        $region32: #{tpu_custom_call.1} parent=27 // pred_fallthru
          _
        // Predicated region
        $region33: #{tpu_custom_call.1} parent=27 // pred_check
          %p181 = pneg %p85
        $region34: #{tpu_custom_call.1} parent=27 // pred_check_branch
          %183 = sbr.rel (%p181) target = $region36
        $region35: #{tpu_custom_call.1} parent=27 // pred_region
          %185 = dma.done [#allocation8], 2048
        $region36: #{tpu_custom_call.1} parent=27 // pred_fallthru
          _
        %s186 = sand.u32 %s51, 1
        %s187 = scalar_lea.sflag [#allocation5], %s186
        %s188 = sand.u32 %s51, 1
        %s189 = smul.addr %s188, 8
        %s190 = scalar_lea.vmem [#allocation4], %s189
        %p191 = pneg %p64
        %p192 = pneg %p61
        %p193 = pneg %p85
        %p194 = pneg %p82
        %p195 = pneg %p111
        %p196 = pneg %p108
        %s197 = sand.u32 %s98, 1
        %s198 = scalar_lea.sflag [#allocation6], %s197
        %s199 = sand.u32 %s98, 1
        %s200 = smul.addr %s199, 8
        %s201 = scalar_lea.vmem [#allocation9], %s200
        %s202 = sadd.s32 %s33, %s34
        %p203 = scmp.eq.s32.totalorder %s34, 0
        // Predicated region
        $region37: #{tpu_custom_call.1} parent=27 // pred_check
          %p204 = pneg %p203
        $region38: #{tpu_custom_call.1} parent=27 // pred_check_branch
          %206 = sbr.rel (%p204) target = $region40
        $region39: #{tpu_custom_call.1} parent=27 // pred_region
          %207 = vst [vmem:[%s201] sm:$0xff] 0.0
        $region40: #{tpu_custom_call.1} parent=27 // pred_fallthru
          _
        %v208 = vlaneseq
        %v209 = vand.u32 %v208, 127
        %vm210 = vcmp.ge.s32.totalorder %v209, 1
        %vm211 = vcmp.le.s32.totalorder %v209, 31
        %vm212 = vmand %vm210, %vm211
        %v213 = vld [vmem:[%s175] sm:$0xff]
        %v214 = vcvt.f32.s32.to.zero.pseudo %v213
        %vm215 = vcmp.eq.s32.totalorder %v209, 16
        %vm216 = vcmp.eq.s32.totalorder %v209, 17
        %vm217 = vcmp.eq.s32.totalorder %v209, 18
        %v218 = vsel %vm217, 1, 0
        %vm219 = vcmp.eq.s32.totalorder %v218, 1
        %221 = vset.pattern.permute.xlu0 2
        %222 = vperm.xlu0 %221, %v213
        %v223 = vpop.permute.xlu0 %222
        %v225 = vsel %vm219, %v223, 0.0
        %v226 = vsel %vm216, 1, 0
        %vm227 = vcmp.eq.s32.totalorder %v226, 1
        %228 = vset.pattern.permute.xlu0 1
        %229 = vperm.xlu0 %228, %v213
        %v230 = vpop.permute.xlu0 %229
        %v232 = vsel %vm227, %v230, %v225
        %v233 = vsel %vm215, 1, 0
        %vm234 = vcmp.eq.s32.totalorder %v233, 1
        %235 = vset.pattern.permute.xlu0 0
        %236 = vperm.xlu0 %235, %v213
        %v237 = vpop.permute.xlu0 %236
        %v239 = vsel %vm234, %v237, %v232
        %s240 = sadd.s32 %s33, %s34
        %s241 = sld [smem:[#allocation3 + %s240]]
        %s242 = ssub.s32 %s241, 1
        // While loop
        $region41: #{tpu_custom_call.1} parent=27 // loop_pre_header
          _
        $region42: #{tpu_custom_call.1} parent=27 // loop_header
          %s244 = sphi 0, %s246
          %p245 = scmp.ge.s32.totalorder %s244, %s242
          %v249 = vphi %v239, %v270
        $region43: #{tpu_custom_call.1} parent=27 // loop_header_branch
          %248 = sbr.rel (%p245) target = $region47
        $region44: #{tpu_custom_call.1} parent=27 // loop_body
          %250 = vrot.lane.b32.xlu0 %v249, 1
          %v251 = vpop.permute.xlu0 %250
          %252 = vrot.lane.b32.xlu0 %v249, 127
          %v253 = vpop.permute.xlu0 %252
          %v254 = vmul.f32 %v237, %v251
          %v255 = vmul.f32 %v230, %v249
          %v256 = vadd.f32 %v254, %v255
          %v257 = vmul.f32 %v223, %v253
          %v258 = vadd.f32 %v256, %v257
          %v259 = vsel %vm212, 1, 0
          %vm260 = vcmp.eq.s32.totalorder %v259, 1
          %v261 = vsel %vm260, %v258, 0.0
          %v262 = vsub.s32 %v214, 1
          %v263 = vstv %s244
          %vm264 = vcmp.lt.s32.totalorder %v263, %v262
          %v265 = vsel %vm264, 1, 0
          %266 = vset.pattern.permute.xlu0 3
          %267 = vperm.xlu0 %266, %v265
          %v268 = vpop.permute.xlu0 %267
          %vm269 = vcmp.eq.s32.totalorder %v268, 1
          %v270 = vsel %vm269, %v261, %v249
        $region45: #{tpu_custom_call.1} parent=27 // loop_footer
          %s246 = sadd.s32 %s244, 1
        $region46: #{tpu_custom_call.1} parent=27 // loop_footer_branch
          %243 = sbr.rel target = $region42
        $region47: #{tpu_custom_call.1} parent=27 // loop_exit
          _
        %v271 = vld [vmem:[#allocation7] sm:$0xff]
        %v272 = vld [vmem:[#allocation7 + $0x8] sm:$0xff]
        %v273 = vld [vmem:[#allocation7 + $0x10] sm:$0xff]
        %v274 = vld [vmem:[#allocation7 + $0x18] sm:$0xff]
        %v275 = vld [vmem:[#allocation7 + $0x20] sm:$0xff]
        %v276 = vld [vmem:[#allocation7 + $0x28] sm:$0xff]
        %v277 = vld [vmem:[#allocation7 + $0x30] sm:$0xff]
        %v278 = vld [vmem:[#allocation7 + $0x38] sm:$0xff]
        %v279 = vld [vmem:[#allocation7 + $0x40] sm:$0xff]
        %v280 = vld [vmem:[#allocation7 + $0x48] sm:$0xff]
        %v281 = vld [vmem:[#allocation7 + $0x50] sm:$0xff]
        %v282 = vld [vmem:[#allocation7 + $0x58] sm:$0xff]
        %v283 = vld [vmem:[#allocation7 + $0x60] sm:$0xff]
        %v284 = vld [vmem:[#allocation7 + $0x68] sm:$0xff]
        %v285 = vld [vmem:[#allocation7 + $0x70] sm:$0xff]
        %v286 = vld [vmem:[#allocation7 + $0x78] sm:$0xff]
        %287 = vmatpush.msra.mxu0 %v286
        %288 = vmatpush.msra.mxu0 %v285
        %289 = vmatpush.msra.mxu0 %v284
        %290 = vmatpush.msra.mxu0 %v283
        %291 = vmatpush.msra.mxu0 %v282
        %292 = vmatpush.msra.mxu0 %v281
        %293 = vmatpush.msra.mxu0 %v280
        %294 = vmatpush.msra.mxu0 %v279
        %295 = vmatpush.msra.mxu0 %v278
        %296 = vmatpush.msra.mxu0 %v277
        %297 = vmatpush.msra.mxu0 %v276
        %298 = vmatpush.msra.mxu0 %v275
        %299 = vmatpush.msra.mxu0 %v274
        %300 = vmatpush.msra.mxu0 %v273
        %301 = vmatpush.msra.mxu0 %v272
        %302 = vmatpush.msra.mxu0 %v271
        %303 = vmatmul.f32.gmra.mxu0 %v249
        %v304 = vpop.f32.mrf.mxu0
        %v305 = vadd.f32 0.0, %v304
        %306 = vdwg.mxu0
        %307 = vset.pattern.permute.xlu0 4
        %308 = vperm.xlu0 %307, %v213
        %v309 = vpop.permute.xlu0 %308
        %v311 = vperm.slane %v273, 0
        %v312 = vmul.f32 %v309, %v311
        %313 = vset.pattern.permute.xlu0 5
        %314 = vperm.xlu0 %313, %v213
        %v315 = vpop.permute.xlu0 %314
        %v317 = vperm.slane %v273, 1
        %v318 = vmul.f32 %v315, %v317
        %v319 = vadd.f32 %v312, %v318
        %320 = vset.pattern.permute.xlu0 6
        %321 = vperm.xlu0 %320, %v213
        %v322 = vpop.permute.xlu0 %321
        %v324 = vperm.slane %v273, 2
        %v325 = vmul.f32 %v322, %v324
        %v326 = vadd.f32 %v319, %v325
        %v327 = vsub.f32 %v305, %v326
        %v328 = vmul.f32 %v327, %v327
        %v329 = vsub.f32 1.0, %v305
        %v330 = vmul.f32 %v329, %v329
        %v331 = vadd.f32 %v330, 0.01
        %v332 = vrcp.pop %v331
        %v333 = vmul.f32 %v331, %v332
        %v334 = vsub.f32 2.0, %v333
        %v335 = vmul.f32 %v332, %v334
        %v336 = vmul.f32 %v328, %v335
        %v337 = vld [vmem:[%s201] sm:$0xff]
        %v338 = vadd.f32 %v337, %v336
        %339 = vst [vmem:[%s201] sm:$0xff] %v338
        %s340 = sand.u32 %s98, 1
        %s341 = scalar_lea.sflag [#allocation6], %s340
        %s342 = sand.u32 %s98, 1
        %s343 = smul.addr %s342, 8
        %s344 = scalar_lea.vmem [#allocation9], %s343
        // Predicated region
        $region48: #{tpu_custom_call.1} parent=27 // pred_check
          %p345 = pneg %p108
        $region49: #{tpu_custom_call.1} parent=27 // pred_check_branch
          %347 = sbr.rel (%p345) target = $region51
        $region50: #{tpu_custom_call.1} parent=27 // pred_region
          %349 = vsyncadd %s341, 0
          %s350 = smul.addr %s33, 8
          %s351 = scalar_lea.hbm %s3, %s350
          %s353 = sshll.u32 %s344, 4
          %s354 = int_to_ptr.vmem [resolvable:$true] %s353
          %s355 = sshll.u32 %s351, 4
          %s356 = int_to_ptr.hbm [resolvable:$true] %s355
          %358 = dma.vmem_to_hbm [thread:$0]  %s354, 128, %s356, %s341
        $region51: #{tpu_custom_call.1} parent=27 // pred_fallthru
          _
      $region28: #{tpu_custom_call.1} parent=5 // pred_fallthru
        _
      %p359 = scmp.le.s32.totalorder 2, %s24
      // Predicated region
      $region52: #{tpu_custom_call.1} parent=5 // pred_check
        %p360 = pneg %p359
      $region53: #{tpu_custom_call.1} parent=5 // pred_check_branch
        %362 = sbr.rel (%p360) target = $region55
      $region54: #{tpu_custom_call.1} parent=5 // pred_region
        %s363 = ssub.s32 %s24, 2
        // Predicated region
        $region56: #{tpu_custom_call.1} parent=54 // pred_check
          %p364 = pneg %p114
        $region57: #{tpu_custom_call.1} parent=54 // pred_check_branch
          %366 = sbr.rel (%p364) target = $region59
        $region58: #{tpu_custom_call.1} parent=54 // pred_region
          %s367 = sand.u32 %s99, 1
          %s368 = scalar_lea.sflag [#allocation6], %s367
          %s369 = sand.u32 %s99, 1
          %s370 = smul.addr %s369, 8
          %s371 = scalar_lea.vmem [#allocation9], %s370
          %373 = dma.done %s368, 128
        $region59: #{tpu_custom_call.1} parent=54 // pred_fallthru
          _
      $region55: #{tpu_custom_call.1} parent=5 // pred_fallthru
        _
    $region6: #{tpu_custom_call.1} parent=1 // loop_footer
      %s28 = sadd.s32 1, %s24
    $region7: #{tpu_custom_call.1} parent=1 // loop_footer_branch
      %23 = sbr.rel target = $region3
    $region8: #{tpu_custom_call.1} parent=1 // loop_exit
      _
    %374 = vsyncpa [#allocation5], 1
    %s375 = scalar_lea.sflag [#allocation5], 1
    %376 = vsyncpa %s375, 1
    %377 = vsyncpa [#allocation8], 1
    %378 = vsyncpa [#allocation6], 1
    %s379 = scalar_lea.sflag [#allocation6], 1
    %380 = vsyncpa %s379, 1

</llo_original>
